<compile_context>
chip_gen: v7x
topology: tpu7x:2x2x1
jax: 0.10.0
libtpu: 0.0.40
codegen_flags: <defaults>
</compile_context>

<pallas_src>
import functools

import jax
import jax.numpy as jnp
from jax.experimental import pallas as pl
from jax.experimental.pallas import tpu as pltpu


def conv_pool_kernel(x_ref,
                     w1_ref, b1_ref, w2_ref, b2_ref, w3_ref, b3_ref,
                     o_ref, acc_ref, *, tn, n_valid, mask_tail):
    k = pl.program_id(1)

    @pl.when(k == 0)
    def _init():
        acc_ref[...] = jnp.full(acc_ref.shape, -jnp.inf, acc_ref.dtype)

    x = x_ref[0]  # (TN, 3) f32 points for this tile of the current batch element

    # conv1/bn1/relu: K=3 contraction done on the VPU as broadcast FMAs
    # (a K=3 MXU pass would be ~97% zero-fed and needs a lane-sparse shuffle).
    h = (x[:, 0:1] * w1_ref[0:1, :]
         + x[:, 1:2] * w1_ref[1:2, :]
         + x[:, 2:3] * w1_ref[2:3, :]
         + b1_ref[...])
    h = jnp.maximum(h, 0.0)

    # conv2/bn2/relu and conv3/bn3/relu: bf16 operands, f32 accumulation (MXU).
    h = jnp.maximum(
        jnp.dot(h.astype(jnp.bfloat16), w2_ref[...],
                preferred_element_type=jnp.float32) + b2_ref[...], 0.0)
    h = jnp.maximum(
        jnp.dot(h.astype(jnp.bfloat16), w3_ref[...],
                preferred_element_type=jnp.float32) + b3_ref[...], 0.0)

    if mask_tail:
        # Padded points must not win the global max.
        idx = k * tn + jax.lax.broadcasted_iota(jnp.int32, (tn, 1), 0)
        h = jnp.where(idx < n_valid, h, -jnp.inf)

    # torch.max(x, 2)[0] as a running max over N tiles.
    acc_ref[...] = jnp.maximum(acc_ref[...], jnp.max(h, axis=0, keepdims=True))

    @pl.when(k == pl.num_programs(1) - 1)
    def _write():
        o_ref[...] = acc_ref[...].reshape(o_ref.shape)


def fc_head_kernel(g_ref, w4_ref, b4_ref, w5_ref, b5_ref, w6_ref, b6_ref,
                   o_ref):
    g = g_ref[...]  # (B, 1024) pooled features, whole batch at once
    h = jnp.maximum(
        jnp.dot(g.astype(jnp.bfloat16), w4_ref[...],
                preferred_element_type=jnp.float32) + b4_ref[...], 0.0)
    h = jnp.maximum(
        jnp.dot(h.astype(jnp.bfloat16), w5_ref[...],
                preferred_element_type=jnp.float32) + b5_ref[...], 0.0)
    o_ref[...] = jnp.dot(h, w6_ref[...],
                         preferred_element_type=jnp.float32) + b6_ref[...]


def init_params(key):
    """Deterministic synthetic parameters; BN folded into the preceding layer."""
    eps = 1e-5
    ks = jax.random.split(key, 22)

    def dense(kw, kb, c_in, c_out, scale=0.05):
        w = scale * jax.random.normal(kw, (c_in, c_out), jnp.float32)
        b = scale * jax.random.normal(kb, (c_out,), jnp.float32)
        return w, b

    def bn_params(kg, kb, c):
        gamma = 1.0 + 0.1 * jax.random.normal(kg, (c,), jnp.float32)
        beta = 0.1 * jax.random.normal(kb, (c,), jnp.float32)
        mean = jnp.zeros((c,), jnp.float32)   # PyTorch default running_mean
        var = jnp.ones((c,), jnp.float32)     # PyTorch default running_var
        return gamma, beta, mean, var

    def fold(w, b, gamma, beta, mean, var):
        s = gamma / jnp.sqrt(var + eps)
        shift = beta - mean * s
        return w * s[None, :], (b * s + shift).reshape(1, -1)

    params = []
    dims = [(3, 64), (64, 128), (128, 1024), (1024, 512), (512, 256)]
    for i, (ci, co) in enumerate(dims):
        w, b = dense(ks[4 * i], ks[4 * i + 1], ci, co)
        g, be, m, v = bn_params(ks[4 * i + 2], ks[4 * i + 3], co)
        params.append(fold(w, b, g, be, m, v))
    # fc3: 256 -> 9, no batchnorm
    w6, b6 = dense(ks[20], ks[21], 256, 9)
    params.append((w6, b6.reshape(1, -1)))
    return params


def _round_up(v, m):
    return (v + m - 1) // m * m


def stn3d_forward(x_ncw, params, *, tn_max=512):
    B, C, N = x_ncw.shape
    assert C == 3
    (w1, b1), (w2, b2), (w3, b3), (w4, b4), (w5, b5), (w6, b6) = params

    # Channels-last: (B, 3, N) -> (B, N, 3).
    x = jnp.transpose(x_ncw, (0, 2, 1)).astype(jnp.float32)

    # Tile N; pad to a multiple of the tile (padded rows masked in-kernel).
    tn = min(tn_max, _round_up(N, 8))
    n_pad = _round_up(N, tn)
    if n_pad != N:
        x = jnp.pad(x, ((0, 0), (0, n_pad - N), (0, 0)))
    num_k = n_pad // tn

    # bf16 operands for the big MXU contractions; biases / elementwise stay f32.
    w2b = w2.astype(jnp.bfloat16)
    w3b = w3.astype(jnp.bfloat16)
    w4b = w4.astype(jnp.bfloat16)
    w5b = w5.astype(jnp.bfloat16)

    def const_spec(a):
        nd = a.ndim
        return pl.BlockSpec(a.shape, lambda b, k, _nd=nd: (0,) * _nd)

    conv_args = [x, w1, b1, w2b, b2, w3b, b3]
    conv_specs = [pl.BlockSpec((1, tn, 3), lambda b, k: (b, k, 0))]
    conv_specs += [const_spec(a) for a in conv_args[1:]]

    kernel = functools.partial(conv_pool_kernel, tn=tn, n_valid=N,
                               mask_tail=(n_pad != N))

    pooled = pl.pallas_call(
        kernel,
        out_shape=jax.ShapeDtypeStruct((B, 1, 1024), jnp.float32),
        grid_spec=pltpu.PrefetchScalarGridSpec(
            num_scalar_prefetch=0,
            grid=(B, num_k),
            in_specs=conv_specs,
            out_specs=pl.BlockSpec((1, 1, 1024), lambda b, k: (b, 0, 0)),
            scratch_shapes=[pltpu.VMEM((1, 1024), jnp.float32)],
        ),
        compiler_params=pltpu.CompilerParams(
            dimension_semantics=("parallel", "arbitrary"),
            vmem_limit_bytes=32 * 1024 * 1024),
    )(*conv_args)

    g = pooled.reshape(B, 1024)

    def full_spec(a):
        nd = a.ndim
        return pl.BlockSpec(a.shape, lambda _nd=nd: (0,) * _nd)

    fc_args = [g, w4b, b4, w5b, b5, w6, b6]
    out = pl.pallas_call(
        fc_head_kernel,
        out_shape=jax.ShapeDtypeStruct((B, 9), jnp.float32),
        in_specs=[full_spec(a) for a in fc_args],
        out_specs=pl.BlockSpec((B, 9), lambda: (0, 0)),
    )(*fc_args)

    # The given forward() does x.view(-1, 3, 3) with no identity addition.
    return out.reshape(B, 3, 3)


if __name__ == "__main__":
    key = jax.random.PRNGKey(0)
    kp, kx = jax.random.split(key)
    params = init_params(kp)

    B, N = 2, 16
    x = jax.random.normal(kx, (B, 3, N), jnp.float32)  # PyTorch NCW layout

    y = stn3d_forward(x, params)
    jax.block_until_ready(y)
    assert y.shape == (B, 3, 3)
    print("KERNEL_OK")
</pallas_src>

<mosaic_0001>
module attributes {stable_mosaic.version = 11 : i64} {
  func.func @conv_pool_kernel(%arg0: i32, %arg1: i32, %arg2: memref<1x16x3xf32, #tpu.memory_space<vmem>>, %arg3: memref<3x64xf32, #tpu.memory_space<vmem>>, %arg4: memref<1x64xf32, #tpu.memory_space<vmem>>, %arg5: memref<64x128xbf16, #tpu.memory_space<vmem>>, %arg6: memref<1x128xf32, #tpu.memory_space<vmem>>, %arg7: memref<128x1024xbf16, #tpu.memory_space<vmem>>, %arg8: memref<1x1024xf32, #tpu.memory_space<vmem>>, %arg9: memref<1x1x1024xf32, #tpu.memory_space<vmem>>, %arg10: memref<1x1024xf32, #tpu.memory_space<vmem>>) attributes {dimension_semantics = [#tpu.dimension_semantics<parallel>, #tpu.dimension_semantics<arbitrary>], iteration_bounds = array<i64: 2, 1>, scalar_prefetch = 0 : i64, scratch_operands = 1 : i64, tpu.core_type = #tpu.core_type<tc>, window_params = [{transform_indices = @transform_0, window_bounds = array<i64: 1, 16, 3>}, {pipeline_mode = #tpu.pipeline_mode<synchronous>, transform_indices = @transform_1, window_bounds = array<i64: 3, 64>}, {pipeline_mode = #tpu.pipeline_mode<synchronous>, transform_indices = @transform_2, window_bounds = array<i64: 1, 64>}, {pipeline_mode = #tpu.pipeline_mode<synchronous>, transform_indices = @transform_3, window_bounds = array<i64: 64, 128>}, {pipeline_mode = #tpu.pipeline_mode<synchronous>, transform_indices = @transform_4, window_bounds = array<i64: 1, 128>}, {pipeline_mode = #tpu.pipeline_mode<synchronous>, transform_indices = @transform_5, window_bounds = array<i64: 128, 1024>}, {pipeline_mode = #tpu.pipeline_mode<synchronous>, transform_indices = @transform_6, window_bounds = array<i64: 1, 1024>}, {transform_indices = @transform_7, window_bounds = array<i64: 1, 1, 1024>}]} {
    %c0_i32 = arith.constant 0 : i32
    %0 = arith.cmpi eq, %arg1, %c0_i32 : i32
    %1 = arith.extui %0 : i1 to i32
    %c0_i32_0 = arith.constant 0 : i32
    %2 = arith.cmpi ne, %1, %c0_i32_0 : i32
    scf.if %2 {
      %cst_28 = arith.constant 0xFF800000 : f32
      %51 = vector.broadcast %cst_28 : f32 to vector<1x1024xf32>
      %c0_29 = arith.constant 0 : index
      %c0_30 = arith.constant 0 : index
      %52 = vector.load %arg10[%c0_29, %c0_30] : memref<1x1024xf32, #tpu.memory_space<vmem>>, vector<1x1024xf32>
      tpu.vector_store %arg10[%c0_29, %c0_30], %51 {strides = array<i32>} : memref<1x1024xf32, #tpu.memory_space<vmem>>, vector<1x1024xf32>,
    } else {
    }
    %c0 = arith.constant 0 : index
    %c0_1 = arith.constant 0 : index
    %c0_2 = arith.constant 0 : index
    %3 = vector.load %arg2[%c0, %c0_1, %c0_2] : memref<1x16x3xf32, #tpu.memory_space<vmem>>, vector<1x16x3xf32>
    %4 = vector.shape_cast %3 : vector<1x16x3xf32> to vector<16x3xf32>
    %5 = vector.extract_strided_slice %4 {offsets = [0, 0], sizes = [16, 1], strides = [1, 1]} : vector<16x3xf32> to vector<16x1xf32>
    %c0_3 = arith.constant 0 : index
    %c0_4 = arith.constant 0 : index
    %6 = vector.load %arg3[%c0_3, %c0_4] : memref<3x64xf32, #tpu.memory_space<vmem>>, vector<1x64xf32>
    %7 = vector.broadcast %5 : vector<16x1xf32> to vector<16x64xf32>
    %8 = vector.broadcast %6 : vector<1x64xf32> to vector<16x64xf32>
    %9 = arith.mulf %7, %8 : vector<16x64xf32>
    %10 = vector.extract_strided_slice %4 {offsets = [0, 1], sizes = [16, 1], strides = [1, 1]} : vector<16x3xf32> to vector<16x1xf32>
    %c1 = arith.constant 1 : index
    %c0_5 = arith.constant 0 : index
    %11 = vector.load %arg3[%c1, %c0_5] : memref<3x64xf32, #tpu.memory_space<vmem>>, vector<1x64xf32>
    %12 = vector.broadcast %10 : vector<16x1xf32> to vector<16x64xf32>
    %13 = vector.broadcast %11 : vector<1x64xf32> to vector<16x64xf32>
    %14 = arith.mulf %12, %13 : vector<16x64xf32>
    %15 = arith.addf %9, %14 : vector<16x64xf32>
    %16 = vector.extract_strided_slice %4 {offsets = [0, 2], sizes = [16, 1], strides = [1, 1]} : vector<16x3xf32> to vector<16x1xf32>
    %c2 = arith.constant 2 : index
    %c0_6 = arith.constant 0 : index
    %17 = vector.load %arg3[%c2, %c0_6] : memref<3x64xf32, #tpu.memory_space<vmem>>, vector<1x64xf32>
    %18 = vector.broadcast %16 : vector<16x1xf32> to vector<16x64xf32>
    %19 = vector.broadcast %17 : vector<1x64xf32> to vector<16x64xf32>
    %20 = arith.mulf %18, %19 : vector<16x64xf32>
    %21 = arith.addf %15, %20 : vector<16x64xf32>
    %c0_7 = arith.constant 0 : index
    %c0_8 = arith.constant 0 : index
    %22 = vector.load %arg4[%c0_7, %c0_8] : memref<1x64xf32, #tpu.memory_space<vmem>>, vector<1x64xf32>
    %23 = vector.broadcast %22 : vector<1x64xf32> to vector<16x64xf32>
    %24 = arith.addf %21, %23 : vector<16x64xf32>
    %cst = arith.constant 0.000000e+00 : f32
    %25 = vector.broadcast %cst : f32 to vector<16x64xf32>
    %26 = arith.maximumf %24, %25 : vector<16x64xf32>
    %27 = arith.truncf %26 : vector<16x64xf32> to vector<16x64xbf16>
    %c0_9 = arith.constant 0 : index
    %c0_10 = arith.constant 0 : index
    %28 = vector.load %arg5[%c0_9, %c0_10] : memref<64x128xbf16, #tpu.memory_space<vmem>>, vector<64x128xbf16>
    %cst_11 = arith.constant dense<0.000000e+00> : vector<16x128xf32>
    %29 = tpu.matmul %27, %28, %cst_11 {dimension_numbers = #tpu.dot_dimension_numbers<[1], [0], [0], [1], [0, 0, 1, 1], [], []>} : vector<16x64xbf16>, vector<64x128xbf16>, vector<16x128xf32> -> vector<16x128xf32>
    %c0_12 = arith.constant 0 : index
    %c0_13 = arith.constant 0 : index
    %30 = vector.load %arg6[%c0_12, %c0_13] : memref<1x128xf32, #tpu.memory_space<vmem>>, vector<1x128xf32>
    %31 = vector.broadcast %30 : vector<1x128xf32> to vector<16x128xf32>
    %32 = arith.addf %29, %31 : vector<16x128xf32>
    %cst_14 = arith.constant 0.000000e+00 : f32
    %33 = vector.broadcast %cst_14 : f32 to vector<16x128xf32>
    %34 = arith.maximumf %32, %33 : vector<16x128xf32>
    %35 = arith.truncf %34 : vector<16x128xf32> to vector<16x128xbf16>
    %c0_15 = arith.constant 0 : index
    %c0_16 = arith.constant 0 : index
    %36 = vector.load %arg7[%c0_15, %c0_16] : memref<128x1024xbf16, #tpu.memory_space<vmem>>, vector<128x1024xbf16>
    %cst_17 = arith.constant dense<0.000000e+00> : vector<16x1024xf32>
    %37 = tpu.matmul %35, %36, %cst_17 {dimension_numbers = #tpu.dot_dimension_numbers<[1], [0], [0], [1], [0, 0, 1, 1], [], []>} : vector<16x128xbf16>, vector<128x1024xbf16>, vector<16x1024xf32> -> vector<16x1024xf32>
    %c0_18 = arith.constant 0 : index
    %c0_19 = arith.constant 0 : index
    %38 = vector.load %arg8[%c0_18, %c0_19] : memref<1x1024xf32, #tpu.memory_space<vmem>>, vector<1x1024xf32>
    %39 = vector.broadcast %38 : vector<1x1024xf32> to vector<16x1024xf32>
    %40 = arith.addf %37, %39 : vector<16x1024xf32>
    %cst_20 = arith.constant 0.000000e+00 : f32
    %41 = vector.broadcast %cst_20 : f32 to vector<16x1024xf32>
    %42 = arith.maximumf %40, %41 : vector<16x1024xf32>
    %c0_21 = arith.constant 0 : index
    %c0_22 = arith.constant 0 : index
    %43 = vector.load %arg10[%c0_21, %c0_22] : memref<1x1024xf32, #tpu.memory_space<vmem>>, vector<1x1024xf32>
    %cst_23 = arith.constant dense<0xFF800000> : vector<1024xf32>
    %44 = vector.multi_reduction <maximumf>, %42, %cst_23 [0] : vector<16x1024xf32> to vector<1024xf32>
    %45 = vector.shape_cast %44 : vector<1024xf32> to vector<1x1024xf32>
    %46 = arith.maximumf %43, %45 : vector<1x1024xf32>
    %c0_24 = arith.constant 0 : index
    %c0_25 = arith.constant 0 : index
    %47 = vector.load %arg10[%c0_24, %c0_25] : memref<1x1024xf32, #tpu.memory_space<vmem>>, vector<1x1024xf32>
    tpu.vector_store %arg10[%c0_24, %c0_25], %46 {strides = array<i32>} : memref<1x1024xf32, #tpu.memory_space<vmem>>, vector<1x1024xf32>,
    %c0_i32_26 = arith.constant 0 : i32
    %48 = arith.cmpi eq, %arg1, %c0_i32_26 : i32
    %49 = arith.extui %48 : i1 to i32
    %c0_i32_27 = arith.constant 0 : i32
    %50 = arith.cmpi ne, %49, %c0_i32_27 : i32
    scf.if %50 {
      %c0_28 = arith.constant 0 : index
      %c0_29 = arith.constant 0 : index
      %51 = vector.load %arg10[%c0_28, %c0_29] : memref<1x1024xf32, #tpu.memory_space<vmem>>, vector<1x1024xf32>
      %52 = vector.shape_cast %51 : vector<1x1024xf32> to vector<1x1x1024xf32>
      %c0_30 = arith.constant 0 : index
      %c0_31 = arith.constant 0 : index
      %c0_32 = arith.constant 0 : index
      %53 = vector.load %arg9[%c0_30, %c0_31, %c0_32] : memref<1x1x1024xf32, #tpu.memory_space<vmem>>, vector<1x1x1024xf32>
      tpu.vector_store %arg9[%c0_30, %c0_31, %c0_32], %52 {strides = array<i32>} : memref<1x1x1024xf32, #tpu.memory_space<vmem>>, vector<1x1x1024xf32>,
    } else {
    }
    return
  }
  func.func @transform_0(%arg0: i32, %arg1: i32) -> (i32, i32, i32) {
    %c0_i32 = arith.constant 0 : i32
    %c0_i32_0 = arith.constant 0 : i32
    return %arg0, %arg1, %c0_i32 : i32, i32, i32
  }
  func.func @transform_1(%arg0: i32, %arg1: i32) -> (i32, i32) {
    %c0_i32 = arith.constant 0 : i32
    %c0_i32_0 = arith.constant 0 : i32
    %c0_i32_1 = arith.constant 0 : i32
    return %c0_i32, %c0_i32_0 : i32, i32
  }
  func.func @transform_2(%arg0: i32, %arg1: i32) -> (i32, i32) {
    %c0_i32 = arith.constant 0 : i32
    %c0_i32_0 = arith.constant 0 : i32
    %c0_i32_1 = arith.constant 0 : i32
    return %c0_i32, %c0_i32_0 : i32, i32
  }
  func.func @transform_3(%arg0: i32, %arg1: i32) -> (i32, i32) {
    %c0_i32 = arith.constant 0 : i32
    %c0_i32_0 = arith.constant 0 : i32
    %c0_i32_1 = arith.constant 0 : i32
    return %c0_i32, %c0_i32_0 : i32, i32
  }
  func.func @transform_4(%arg0: i32, %arg1: i32) -> (i32, i32) {
    %c0_i32 = arith.constant 0 : i32
    %c0_i32_0 = arith.constant 0 : i32
    %c0_i32_1 = arith.constant 0 : i32
    return %c0_i32, %c0_i32_0 : i32, i32
  }
  func.func @transform_5(%arg0: i32, %arg1: i32) -> (i32, i32) {
    %c0_i32 = arith.constant 0 : i32
    %c0_i32_0 = arith.constant 0 : i32
    %c0_i32_1 = arith.constant 0 : i32
    return %c0_i32, %c0_i32_0 : i32, i32
  }
  func.func @transform_6(%arg0: i32, %arg1: i32) -> (i32, i32) {
    %c0_i32 = arith.constant 0 : i32
    %c0_i32_0 = arith.constant 0 : i32
    %c0_i32_1 = arith.constant 0 : i32
    return %c0_i32, %c0_i32_0 : i32, i32
  }
  func.func @transform_7(%arg0: i32, %arg1: i32) -> (i32, i32, i32) {
    %c0_i32 = arith.constant 0 : i32
    %c0_i32_0 = arith.constant 0 : i32
    %c0_i32_1 = arith.constant 0 : i32
    return %arg0, %c0_i32, %c0_i32_0 : i32, i32, i32
  }
}

</mosaic_0001>

<llo_original>
// kernel: tpu_custom_call.1
$region0: #{tpu_custom_call.1}
  #allocation0 [shape = 'u32[]', space=smem, size = 0x4, offset = 0x4, fixed_abs, tag = 'smem constant byte address 0x4 - core index']
  #allocation1 [shape = 'u32[144,128]{1,0:T(1,128)}', space=vmem, size = 0x12000, scoped, tag = 'internal scratch']
  #allocation2 [shape = 'f32[1,1024]{1,0:T(1,128)}', space=vmem, size = 0x1000, scoped, tag = 'scratch operand']
  %s0 = inlined_call_operand.vmem [shape: f32[2,16,3], index: 0, kind: input, shape index: {}]
  %s1 = inlined_call_operand.vmem [shape: f32[3,64], index: 1, kind: input, shape index: {}]
  %s2 = inlined_call_operand.vmem [shape: f32[1,64], index: 2, kind: input, shape index: {}]
  %s3 = inlined_call_operand.vmem [shape: bf16[64,128], index: 3, kind: input, shape index: {}]
  %s4 = inlined_call_operand.vmem [shape: f32[1,128], index: 4, kind: input, shape index: {}]
  %s5 = inlined_call_operand.hbm [shape: bf16[128,1024], index: 5, kind: input, shape index: {}]
  %s6 = inlined_call_operand.vmem [shape: f32[1,1024], index: 6, kind: input, shape index: {}]
  %s7 = inlined_call_operand.hbm [shape: f32[2,1,1024], index: 7, kind: output, shape index: {}]
  %s8 = sld [smem:[#allocation0]]
  $region73: #{tpu_custom_call.1} parent=0
    _
  %s10 = ssub.s32 1, %s8
  %s11 = scalar_select 0, %s10, %s8
  $region1: #{tpu_custom_call.1} parent=0
    #allocation3 [shape = 'u8[262144]{0}', space=vmem, size = 0x40000, scoped, tag = 'input window, operand 5, single buffered']
    #allocation4 [shape = 's32[2]{0}', space=sflag, size = 0x8, scoped, tag = 'scoped memory for tpu_custom_call.1']
    #allocation5 [shape = 's32[2]{0}', space=sflag, size = 0x8, scoped, tag = 'scoped memory for tpu_custom_call.1']
    #allocation6 [shape = 'u8[8192]{0}', space=vmem, size = 0x2000, scoped, tag = 'output window, operand 0']
    %12 = vsyncpa [#allocation4], 0
    %13 = vsyncpa [#allocation5], 0
    %s14 = scalar_lea.sflag [#allocation5], 1
    %15 = vsyncpa %s14, 0
    loop: start=0, step=1, limit=4
    $region2: #{tpu_custom_call.1} parent=1 // loop_pre_header
      _
    $region3: #{tpu_custom_call.1} parent=1 // loop_header
      %s17 = sphi 0, %s21
      %p18 = scmp.ge.s32.totalorder %s17, 4
      %s24 = sphi 0, %s36
      %s25 = sphi 0, %s32
      %s26 = sphi 0, %s24
      %s27 = sphi 0, %s25
      %s28 = sphi 0, %s26
      %s29 = sphi 0, %s27
      %s41 = sphi 0, %s43
      %s44 = sphi 0, %s41
      %s45 = sphi 0, %s44
      %s61 = sphi 0, %s45
      %s65 = sphi 0, %s65
      %s67 = sphi 0, %s65
      %s68 = sphi 0, %s67
      %s82 = sphi 0, %s68
      %s86 = sphi 0, %s86
      %s88 = sphi 0, %s86
      %s89 = sphi 0, %s88
      %s103 = sphi 0, %s89
      %s107 = sphi 0, %s107
      %s109 = sphi 0, %s107
      %s110 = sphi 0, %s109
      %s124 = sphi 0, %s110
      %s128 = sphi 0, %s128
      %s130 = sphi 0, %s128
      %s131 = sphi 0, %s130
      %s145 = sphi 0, %s131
      %s149 = sphi 0, %s149
      %s151 = sphi 0, %s149
      %s152 = sphi 0, %s151
      %s166 = sphi 0, %s152
      %s170 = sphi 0, %s170
      %s172 = sphi 0, %s170
      %s173 = sphi 0, %s172
      %s187 = sphi 0, %s173
      %s193 = sphi 0, %s195
      %s196 = sphi 0, %s193
      %s197 = sphi 0, %s196
      %s213 = sphi 0, %s197
    $region4: #{tpu_custom_call.1} parent=1 // loop_header_branch
      %20 = sbr.rel (%p18) target = $region8
    $region5: #{tpu_custom_call.1} parent=1 // loop_body
      %s22 = ssub.s32 %s17, 1
      %s23 = ssub.s32 %s17, 2
      %s30 = sadd.s32 1, %s25
      %p31 = scmp.ge.s32.totalorder %s30, 1
      %s32 = scalar_select %p31, 0, %s30
      %s33 = sadd.s32 1, %s24
      %s34 = scalar_select %p31, %s33, %s24
      %p35 = scmp.ge.s32.totalorder %s34, 2
      %s36 = scalar_select %p35, 0, %s34
      %s37 = ssub.s32 %s24, %s36
      %s38 = ssub.s32 %s25, %s32
      %s39 = sor.u32 %s37, %s38
      %p40 = scmp.eq.s32.totalorder %s39, 0
      %s42 = sadd.s32 %s41, 1
      %s43 = scalar_select %p40, %s41, %s42
      %p46 = pneg %p40
      %p47 = scmp.eq.s32.totalorder %s17, 1
      %p48 = por %p46, %p47
      %p49 = scmp.ne.s32.totalorder %s41, %s44
      %p50 = scmp.eq.s32.totalorder %s17, 0
      %p51 = por %p49, %p50
      %p52 = scmp.ne.s32.totalorder %s41, %s44
      %p53 = scmp.eq.s32.totalorder %s22, 1
      %p54 = por %p52, %p53
      %p55 = scmp.ne.s32.totalorder %s44, %s45
      %p56 = scmp.eq.s32.totalorder %s22, 0
      %p57 = por %p55, %p56
      %p58 = scmp.ne.s32.totalorder %s44, %s45
      %p59 = scmp.eq.s32.totalorder %s23, 1
      %p60 = por %p58, %p59
      %p62 = scmp.ne.s32.totalorder %s45, %s61
      %p63 = scmp.eq.s32.totalorder %s23, 0
      %p64 = por %p62, %p63
      %s66 = sadd.s32 %s65, 1
      %p69 = scmp.eq.s32.totalorder %s17, 1
      %p70 = scmp.ne.s32.totalorder %s65, %s67
      %p71 = scmp.eq.s32.totalorder %s17, 0
      %p72 = por %p70, %p71
      %p73 = scmp.ne.s32.totalorder %s65, %s67
      %p74 = scmp.eq.s32.totalorder %s22, 1
      %p75 = por %p73, %p74
      %p76 = scmp.ne.s32.totalorder %s67, %s68
      %p77 = scmp.eq.s32.totalorder %s22, 0
      %p78 = por %p76, %p77
      %p79 = scmp.ne.s32.totalorder %s67, %s68
      %p80 = scmp.eq.s32.totalorder %s23, 1
      %p81 = por %p79, %p80
      %p83 = scmp.ne.s32.totalorder %s68, %s82
      %p84 = scmp.eq.s32.totalorder %s23, 0
      %p85 = por %p83, %p84
      %s87 = sadd.s32 %s86, 1
      %p90 = scmp.eq.s32.totalorder %s17, 1
      %p91 = scmp.ne.s32.totalorder %s86, %s88
      %p92 = scmp.eq.s32.totalorder %s17, 0
      %p93 = por %p91, %p92
      %p94 = scmp.ne.s32.totalorder %s86, %s88
      %p95 = scmp.eq.s32.totalorder %s22, 1
      %p96 = por %p94, %p95
      %p97 = scmp.ne.s32.totalorder %s88, %s89
      %p98 = scmp.eq.s32.totalorder %s22, 0
      %p99 = por %p97, %p98
      %p100 = scmp.ne.s32.totalorder %s88, %s89
      %p101 = scmp.eq.s32.totalorder %s23, 1
      %p102 = por %p100, %p101
      %p104 = scmp.ne.s32.totalorder %s89, %s103
      %p105 = scmp.eq.s32.totalorder %s23, 0
      %p106 = por %p104, %p105
      %s108 = sadd.s32 %s107, 1
      %p111 = scmp.eq.s32.totalorder %s17, 1
      %p112 = scmp.ne.s32.totalorder %s107, %s109
      %p113 = scmp.eq.s32.totalorder %s17, 0
      %p114 = por %p112, %p113
      %p115 = scmp.ne.s32.totalorder %s107, %s109
      %p116 = scmp.eq.s32.totalorder %s22, 1
      %p117 = por %p115, %p116
      %p118 = scmp.ne.s32.totalorder %s109, %s110
      %p119 = scmp.eq.s32.totalorder %s22, 0
      %p120 = por %p118, %p119
      %p121 = scmp.ne.s32.totalorder %s109, %s110
      %p122 = scmp.eq.s32.totalorder %s23, 1
      %p123 = por %p121, %p122
      %p125 = scmp.ne.s32.totalorder %s110, %s124
      %p126 = scmp.eq.s32.totalorder %s23, 0
      %p127 = por %p125, %p126
      %s129 = sadd.s32 %s128, 1
      %p132 = scmp.eq.s32.totalorder %s17, 1
      %p133 = scmp.ne.s32.totalorder %s128, %s130
      %p134 = scmp.eq.s32.totalorder %s17, 0
      %p135 = por %p133, %p134
      %p136 = scmp.ne.s32.totalorder %s128, %s130
      %p137 = scmp.eq.s32.totalorder %s22, 1
      %p138 = por %p136, %p137
      %p139 = scmp.ne.s32.totalorder %s130, %s131
      %p140 = scmp.eq.s32.totalorder %s22, 0
      %p141 = por %p139, %p140
      %p142 = scmp.ne.s32.totalorder %s130, %s131
      %p143 = scmp.eq.s32.totalorder %s23, 1
      %p144 = por %p142, %p143
      %p146 = scmp.ne.s32.totalorder %s131, %s145
      %p147 = scmp.eq.s32.totalorder %s23, 0
      %p148 = por %p146, %p147
      %s150 = sadd.s32 %s149, 1
      %p153 = scmp.eq.s32.totalorder %s17, 1
      %p154 = scmp.ne.s32.totalorder %s149, %s151
      %p155 = scmp.eq.s32.totalorder %s17, 0
      %p156 = por %p154, %p155
      %p157 = scmp.ne.s32.totalorder %s149, %s151
      %p158 = scmp.eq.s32.totalorder %s22, 1
      %p159 = por %p157, %p158
      %p160 = scmp.ne.s32.totalorder %s151, %s152
      %p161 = scmp.eq.s32.totalorder %s22, 0
      %p162 = por %p160, %p161
      %p163 = scmp.ne.s32.totalorder %s151, %s152
      %p164 = scmp.eq.s32.totalorder %s23, 1
      %p165 = por %p163, %p164
      %p167 = scmp.ne.s32.totalorder %s152, %s166
      %p168 = scmp.eq.s32.totalorder %s23, 0
      %p169 = por %p167, %p168
      %s171 = sadd.s32 %s170, 1
      %p174 = scmp.eq.s32.totalorder %s17, 1
      %p175 = scmp.ne.s32.totalorder %s170, %s172
      %p176 = scmp.eq.s32.totalorder %s17, 0
      %p177 = por %p175, %p176
      %p178 = scmp.ne.s32.totalorder %s170, %s172
      %p179 = scmp.eq.s32.totalorder %s22, 1
      %p180 = por %p178, %p179
      %p181 = scmp.ne.s32.totalorder %s172, %s173
      %p182 = scmp.eq.s32.totalorder %s22, 0
      %p183 = por %p181, %p182
      %p184 = scmp.ne.s32.totalorder %s172, %s173
      %p185 = scmp.eq.s32.totalorder %s23, 1
      %p186 = por %p184, %p185
      %p188 = scmp.ne.s32.totalorder %s173, %s187
      %p189 = scmp.eq.s32.totalorder %s23, 0
      %p190 = por %p188, %p189
      %s191 = ssub.s32 %s24, %s36
      %p192 = scmp.eq.s32.totalorder %s191, 0
      %s194 = sadd.s32 %s193, 1
      %s195 = scalar_select %p192, %s193, %s194
      %p198 = pneg %p192
      %p199 = scmp.eq.s32.totalorder %s17, 1
      %p200 = por %p198, %p199
      %p201 = scmp.ne.s32.totalorder %s193, %s196
      %p202 = scmp.eq.s32.totalorder %s17, 0
      %p203 = por %p201, %p202
      %p204 = scmp.ne.s32.totalorder %s193, %s196
      %p205 = scmp.eq.s32.totalorder %s22, 1
      %p206 = por %p204, %p205
      %p207 = scmp.ne.s32.totalorder %s196, %s197
      %p208 = scmp.eq.s32.totalorder %s22, 0
      %p209 = por %p207, %p208
      %p210 = scmp.ne.s32.totalorder %s196, %s197
      %p211 = scmp.eq.s32.totalorder %s23, 1
      %p212 = por %p210, %p211
      %p214 = scmp.ne.s32.totalorder %s197, %s213
      %p215 = scmp.eq.s32.totalorder %s23, 0
      %p216 = por %p214, %p215
      %p217 = scmp.le.s32.totalorder 1, %s17
      %p218 = scmp.lt.s32.totalorder %s17, 3
      %p219 = pnand %p217, %p218
      %p220 = pneg %p219
      // Predicated region
      $region9: #{tpu_custom_call.1} parent=5 // pred_check
        _
      $region10: #{tpu_custom_call.1} parent=5 // pred_check_branch
        %222 = sbr.rel (%p219) target = $region12
      $region11: #{tpu_custom_call.1} parent=5 // pred_region
        %s223 = ssub.s32 %s17, 1
        // Predicated region
        $region13: #{tpu_custom_call.1} parent=11 // pred_check
          %p224 = pneg %p78
        $region14: #{tpu_custom_call.1} parent=11 // pred_check_branch
          %226 = sbr.rel (%p224) target = $region16
        $region15: #{tpu_custom_call.1} parent=11 // pred_region
          _
        $region16: #{tpu_custom_call.1} parent=11 // pred_fallthru
          _
        // Predicated region
        $region17: #{tpu_custom_call.1} parent=11 // pred_check
          %p227 = pneg %p99
        $region18: #{tpu_custom_call.1} parent=11 // pred_check_branch
          %229 = sbr.rel (%p227) target = $region20
        $region19: #{tpu_custom_call.1} parent=11 // pred_region
          _
        $region20: #{tpu_custom_call.1} parent=11 // pred_fallthru
          _
        // Predicated region
        $region21: #{tpu_custom_call.1} parent=11 // pred_check
          %p230 = pneg %p120
        $region22: #{tpu_custom_call.1} parent=11 // pred_check_branch
          %232 = sbr.rel (%p230) target = $region24
        $region23: #{tpu_custom_call.1} parent=11 // pred_region
          _
        $region24: #{tpu_custom_call.1} parent=11 // pred_fallthru
          _
        // Predicated region
        $region25: #{tpu_custom_call.1} parent=11 // pred_check
          %p233 = pneg %p141
        $region26: #{tpu_custom_call.1} parent=11 // pred_check_branch
          %235 = sbr.rel (%p233) target = $region28
        $region27: #{tpu_custom_call.1} parent=11 // pred_region
          _
        $region28: #{tpu_custom_call.1} parent=11 // pred_fallthru
          _
        // Predicated region
        $region29: #{tpu_custom_call.1} parent=11 // pred_check
          %p236 = pneg %p162
        $region30: #{tpu_custom_call.1} parent=11 // pred_check_branch
          %238 = sbr.rel (%p236) target = $region32
        $region31: #{tpu_custom_call.1} parent=11 // pred_region
          %s240 = ssub.s32 8192, 8192
          %241 = vsyncadd [#allocation4], %s240
          %s242 = sshll.u32 [#allocation3], 4
          %s243 = int_to_ptr.vmem [resolvable:$true] %s242
          %248 = dma.hbm_to_vmem [thread:$0]  %s5, 8192, %s243, [#allocation4], 512, 512, 32
        $region32: #{tpu_custom_call.1} parent=11 // pred_fallthru
          _
        // Predicated region
        $region33: #{tpu_custom_call.1} parent=11 // pred_check
          %p249 = pneg %p183
        $region34: #{tpu_custom_call.1} parent=11 // pred_check_branch
          %251 = sbr.rel (%p249) target = $region36
        $region35: #{tpu_custom_call.1} parent=11 // pred_region
          _
        $region36: #{tpu_custom_call.1} parent=11 // pred_fallthru
          _
      $region12: #{tpu_custom_call.1} parent=5 // pred_fallthru
        _
      %p252 = scmp.lt.s32.totalorder %s17, 2
      // Predicated region
      $region37: #{tpu_custom_call.1} parent=5 // pred_check
        %p253 = pneg %p252
      $region38: #{tpu_custom_call.1} parent=5 // pred_check_branch
        %255 = sbr.rel (%p253) target = $region40
      $region39: #{tpu_custom_call.1} parent=5 // pred_region
        // Predicated region
        $region41: #{tpu_custom_call.1} parent=39 // pred_check
          %p256 = pneg %p51
        $region42: #{tpu_custom_call.1} parent=39 // pred_check_branch
          %258 = sbr.rel (%p256) target = $region44
        $region43: #{tpu_custom_call.1} parent=39 // pred_region
          %s259 = smul.u32 2, %s25
          %p260 = scmp.lt.s32.totalorder %s24, 1
          %s261 = scalar_select %p260, %s24, 1
          %p262 = scmp.lt.s32.totalorder %s259, 1
          %s263 = scalar_select %p262, %s259, 1
          %s264 = smul.addr %s261, 2
          %s265 = sadd.s32 %s263, %s264
          %s266 = smul.addr %s265, 8
          %s267 = scalar_lea.vmem %s0, %s266
          %s268 = smul.u32 2, %s25
        $region44: #{tpu_custom_call.1} parent=39 // pred_fallthru
          _
      $region40: #{tpu_custom_call.1} parent=5 // pred_fallthru
        _
      %p269 = scmp.le.s32.totalorder 1, %s17
      %p270 = scmp.lt.s32.totalorder %s17, 3
      %p271 = pnand %p269, %p270
      %p272 = pneg %p271
      // Predicated region
      $region45: #{tpu_custom_call.1} parent=5 // pred_check
        _
      $region46: #{tpu_custom_call.1} parent=5 // pred_check_branch
        %274 = sbr.rel (%p271) target = $region48
      $region47: #{tpu_custom_call.1} parent=5 // pred_region
        %s275 = ssub.s32 %s17, 1
        // Predicated region
        $region49: #{tpu_custom_call.1} parent=47 // pred_check
          %p276 = pneg %p162
        $region50: #{tpu_custom_call.1} parent=47 // pred_check_branch
          %278 = sbr.rel (%p276) target = $region52
        $region51: #{tpu_custom_call.1} parent=47 // pred_region
          %279 = dma.done [#allocation4], 8192
        $region52: #{tpu_custom_call.1} parent=47 // pred_fallthru
          _
        %s280 = smul.u32 2, %s27
        %p281 = scmp.lt.s32.totalorder %s26, 1
        %s282 = scalar_select %p281, %s26, 1
        %p283 = scmp.lt.s32.totalorder %s280, 1
        %s284 = scalar_select %p283, %s280, 1
        %s285 = smul.addr %s282, 2
        %s286 = sadd.s32 %s284, %s285
        %s287 = smul.addr %s286, 8
        %s288 = scalar_lea.vmem %s0, %s287
        %p289 = pneg %p57
        %p290 = pneg %p54
        %p291 = pneg %p78
        %p292 = pneg %p75
        %p293 = pneg %p99
        %p294 = pneg %p96
        %p295 = pneg %p120
        %p296 = pneg %p117
        %p297 = pneg %p141
        %p298 = pneg %p138
        %p299 = pneg %p162
        %p300 = pneg %p159
        %p301 = pneg %p183
        %p302 = pneg %p180
        %p303 = pneg %p209
        %p304 = pneg %p206
        %s305 = sand.u32 %s196, 1
        %s306 = scalar_lea.sflag [#allocation5], %s305
        %s307 = sand.u32 %s196, 1
        %s308 = smul.addr %s307, 8
        %s309 = scalar_lea.vmem [#allocation6], %s308
        %s310 = smul.u32 2, %s27
        %p311 = scmp.lt.s32.totalorder %s26, 1
        %s312 = scalar_select %p311, %s26, 1
        %p313 = scmp.lt.s32.totalorder %s310, 1
        %s314 = scalar_select %p313, %s310, 1
        %s315 = smul.addr %s312, 2
        %s316 = sadd.s32 %s314, %s315
        %s317 = smul.addr %s316, 8
        %s318 = scalar_lea.vmem %s0, %s317
        %s319 = smul.u32 2, %s27
        %p321 = scmp.eq.s32.totalorder %s27, 0
        // Predicated region
        $region53: #{tpu_custom_call.1} parent=47 // pred_check
          %p322 = pneg %p321
        $region54: #{tpu_custom_call.1} parent=47 // pred_check_branch
          %324 = sbr.rel (%p322) target = $region56
        $region55: #{tpu_custom_call.1} parent=47 // pred_region
          %325 = vst [vmem:[#allocation2] sm:$0xff] -inf
        $region56: #{tpu_custom_call.1} parent=47 // pred_fallthru
          _
        %v326 = vld [vmem:[%s318] sm:$0xff]
        %v327 = vld [vmem:[%s318 + $0x8] sm:$0xff]
        %v328 = vld [vmem:[%s1] sm:$0x1]
        %330 = vset.pattern.permute.xlu0 0
        %331 = vperm.xlu0 %330, %v326
        %v332 = vpop.permute.xlu0 %331
        %335 = vset.pattern.permute.xlu0 0
        %336 = vperm.xlu0 %335, %v327
        %v337 = vpop.permute.xlu0 %336
        %v339 = vlaneseq
        %v340 = vshrl.u32 %v339, 7
        %v341 = vsub.s32 0, %v340
        %v342 = vrot.slane %v328, %v341
        %v343 = vmul.f32 %v332, %v342
        %v344 = vmul.f32 %v337, %v342
        %v345 = vld [vmem:[%s1 + $0x1] sm:$0x1]
        %346 = vset.pattern.permute.xlu0 1
        %347 = vperm.xlu0 %346, %v326
        %v348 = vpop.permute.xlu0 %347
        %350 = vset.pattern.permute.xlu0 1
        %351 = vperm.xlu0 %350, %v327
        %v352 = vpop.permute.xlu0 %351
        %v354 = vlaneseq
        %v355 = vshrl.u32 %v354, 7
        %v356 = vsub.s32 0, %v355
        %v357 = vrot.slane %v345, %v356
        %v358 = vmul.f32 %v348, %v357
        %v359 = vmul.f32 %v352, %v357
        %v360 = vadd.f32 %v343, %v358
        %v361 = vadd.f32 %v344, %v359
        %v362 = vld [vmem:[%s1 + $0x2] sm:$0x1]
        %363 = vset.pattern.permute.xlu0 2
        %364 = vperm.xlu0 %363, %v326
        %v365 = vpop.permute.xlu0 %364
        %367 = vset.pattern.permute.xlu0 2
        %368 = vperm.xlu0 %367, %v327
        %v369 = vpop.permute.xlu0 %368
        %v371 = vlaneseq
        %v372 = vshrl.u32 %v371, 7
        %v373 = vsub.s32 0, %v372
        %v374 = vrot.slane %v362, %v373
        %v375 = vmul.f32 %v365, %v374
        %v376 = vmul.f32 %v369, %v374
        %v377 = vadd.f32 %v360, %v375
        %v378 = vadd.f32 %v361, %v376
        %v379 = vld [vmem:[%s2] sm:$0x1]
        %v381 = vlaneseq
        %v382 = vshrl.u32 %v381, 7
        %v383 = vsub.s32 0, %v382
        %v384 = vrot.slane %v379, %v383
        %v386 = vadd.f32 %v377, %v384
        %v387 = vadd.f32 %v378, %v384
        %v388 = vmax.f32 %v386, 0.0
        %v389 = vmax.f32 %v387, 0.0
        %v390 = vpack.c.bf16 %v389, %v388
        %v391 = vld [vmem:[%s3] sm:$0xf]
        %v392 = vld [vmem:[%s3 + $0x4] sm:$0xf]
        %v393 = vld [vmem:[%s3 + $0x8] sm:$0xf]
        %v394 = vld [vmem:[%s3 + $0xc] sm:$0xf]
        %v395 = vld [vmem:[%s3 + $0x10] sm:$0xf]
        %v396 = vld [vmem:[%s3 + $0x14] sm:$0xf]
        %v397 = vld [vmem:[%s3 + $0x18] sm:$0xf]
        %v398 = vld [vmem:[%s3 + $0x1c] sm:$0xf]
        %v399 = vld [vmem:[%s4] sm:$0x1]
        %v401 = vlaneseq
        %v402 = vshrl.u32 %v401, 7
        %v403 = vsub.s32 0, %v402
        %v404 = vrot.slane %v399, %v403
        %v414 = vunpack.c.l.b16 %v391
        %v415 = vunpack.c.l.b16 %v392
        %v416 = vunpack.c.l.b16 %v393
        %v417 = vunpack.c.l.b16 %v394
        %v418 = vunpack.c.l.b16 %v395
        %v419 = vunpack.c.l.b16 %v396
        %v420 = vunpack.c.l.b16 %v397
        %v421 = vunpack.c.l.b16 %v398
        %v422 = vpack.c.b16 %v415, %v414
        %v423 = vpack.c.b16 %v417, %v416
        %v424 = vpack.c.b16 %v419, %v418
        %v425 = vpack.c.b16 %v421, %v420
        %vm430 = vcmask 523264
        %v432 = vsel %vm430, %v390, 0
        %434 = vmatprep.subr.bf16.mxu0 0
        %435 = vmatpush1.bf16.msra.mxu0 %v422
        %436 = vmatprep.subr.bf16.mxu0 0
        %437 = vmatpush1.bf16.msra.mxu0 %v423
        %438 = vmatprep.subr.bf16.mxu0 0
        %439 = vmatpush1.bf16.msra.mxu0 %v424
        %440 = vmatprep.subr.bf16.mxu0 0
        %441 = vmatpush1.bf16.msra.mxu0 %v425
        %442 = vmatprep.subr.bf16.mxu0 0
        %443 = vmatpush1.bf16.msra.mxu0 0
        %444 = vmatprep.subr.bf16.mxu0 0
        %445 = vmatpush1.bf16.msra.mxu0 0
        %446 = vmatprep.subr.bf16.mxu0 0
        %447 = vmatpush1.bf16.msra.mxu0 0
        %448 = vmatprep.subr.bf16.mxu0 0
        %449 = vmatpush1.bf16.msra.mxu0 0
        %450 = vmatprep.subr.bf16.mxu0 0
        %451 = vmatpush1.bf16.msra.mxu0 0
        %452 = vmatprep.subr.bf16.mxu0 0
        %453 = vmatpush1.bf16.msra.mxu0 0
        %454 = vmatprep.subr.bf16.mxu0 0
        %455 = vmatpush1.bf16.msra.mxu0 0
        %456 = vmatprep.subr.bf16.mxu0 0
        %457 = vmatpush1.bf16.msra.mxu0 0
        %458 = vmatprep.subr.bf16.mxu0 0
        %459 = vmatpush1.bf16.msra.mxu0 0
        %460 = vmatprep.subr.bf16.mxu0 0
        %461 = vmatpush1.bf16.msra.mxu0 0
        %462 = vmatprep.subr.bf16.mxu0 0
        %463 = vmatpush1.bf16.msra.mxu0 0
        %464 = vmatprep.subr.bf16.mxu0 0
        %465 = vmatpush1.bf16.msra.mxu0 0
        %466 = vmatprep.mubr.bf16.mxu0 0
        %467 = vmatmul.mubr.bf16.gmra.mrb[0].mxu0 %v432
        %v468 = vpop.f32.mrb[0].mxu0
        %v469 = vadd.f32 %v404, %v468
        %v470 = vpop.f32.mrb[0].mxu0
        %v471 = vpop.f32.mrb[0].mxu0
        %v472 = vadd.f32 %v404, %v471
        %v473 = vpop.f32.mrb[0].mxu0
        %474 = vdwg.mxu0
        %v475 = vmax.f32 %v469, 0.0
        %v476 = vmax.f32 %v472, 0.0
        %v477 = vpack.c.bf16 %v476, %v475
        %v478 = vld [vmem:[#allocation3] sm:$0xff]
        %v479 = vld [vmem:[#allocation3 + $0x8] sm:$0xff]
        %v480 = vld [vmem:[#allocation3 + $0x10] sm:$0xff]
        %v481 = vld [vmem:[#allocation3 + $0x18] sm:$0xff]
        %v482 = vld [vmem:[#allocation3 + $0x20] sm:$0xff]
        %v483 = vld [vmem:[#allocation3 + $0x28] sm:$0xff]
        %v484 = vld [vmem:[#allocation3 + $0x30] sm:$0xff]
        %v485 = vld [vmem:[#allocation3 + $0x38] sm:$0xff]
        %v486 = vld [vmem:[#allocation3 + $0x40] sm:$0xff]
        %v487 = vld [vmem:[#allocation3 + $0x48] sm:$0xff]
        %v488 = vld [vmem:[#allocation3 + $0x50] sm:$0xff]
        %v489 = vld [vmem:[#allocation3 + $0x58] sm:$0xff]
        %v490 = vld [vmem:[#allocation3 + $0x60] sm:$0xff]
        %v491 = vld [vmem:[#allocation3 + $0x68] sm:$0xff]
        %v492 = vld [vmem:[#allocation3 + $0x70] sm:$0xff]
        %v493 = vld [vmem:[#allocation3 + $0x78] sm:$0xff]
        %v494 = vld [vmem:[#allocation3 + $0x80] sm:$0xff]
        %v495 = vld [vmem:[#allocation3 + $0x88] sm:$0xff]
        %v496 = vld [vmem:[#allocation3 + $0x90] sm:$0xff]
        %v497 = vld [vmem:[#allocation3 + $0x98] sm:$0xff]
        %v498 = vld [vmem:[#allocation3 + $0xa0] sm:$0xff]
        %v499 = vld [vmem:[#allocation3 + $0xa8] sm:$0xff]
        %v500 = vld [vmem:[#allocation3 + $0xb0] sm:$0xff]
        %v501 = vld [vmem:[#allocation3 + $0xb8] sm:$0xff]
        %v502 = vld [vmem:[#allocation3 + $0xc0] sm:$0xff]
        %v503 = vld [vmem:[#allocation3 + $0xc8] sm:$0xff]
        %v504 = vld [vmem:[#allocation3 + $0xd0] sm:$0xff]
        %v505 = vld [vmem:[#allocation3 + $0xd8] sm:$0xff]
        %v506 = vld [vmem:[#allocation3 + $0xe0] sm:$0xff]
        %v507 = vld [vmem:[#allocation3 + $0xe8] sm:$0xff]
        %v508 = vld [vmem:[#allocation3 + $0xf0] sm:$0xff]
        %v509 = vld [vmem:[#allocation3 + $0xf8] sm:$0xff]
        %v510 = vld [vmem:[#allocation3 + $0x100] sm:$0xff]
        %v511 = vld [vmem:[#allocation3 + $0x108] sm:$0xff]
        %v512 = vld [vmem:[#allocation3 + $0x110] sm:$0xff]
        %v513 = vld [vmem:[#allocation3 + $0x118] sm:$0xff]
        %v514 = vld [vmem:[#allocation3 + $0x120] sm:$0xff]
        %v515 = vld [vmem:[#allocation3 + $0x128] sm:$0xff]
        %v516 = vld [vmem:[#allocation3 + $0x130] sm:$0xff]
        %v517 = vld [vmem:[#allocation3 + $0x138] sm:$0xff]
        %v518 = vld [vmem:[#allocation3 + $0x140] sm:$0xff]
        %v519 = vld [vmem:[#allocation3 + $0x148] sm:$0xff]
        %v520 = vld [vmem:[#allocation3 + $0x150] sm:$0xff]
        %v521 = vld [vmem:[#allocation3 + $0x158] sm:$0xff]
        %v522 = vld [vmem:[#allocation3 + $0x160] sm:$0xff]
        %v523 = vld [vmem:[#allocation3 + $0x168] sm:$0xff]
        %v524 = vld [vmem:[#allocation3 + $0x170] sm:$0xff]
        %v525 = vld [vmem:[#allocation3 + $0x178] sm:$0xff]
        %v526 = vld [vmem:[#allocation3 + $0x180] sm:$0xff]
        %v527 = vld [vmem:[#allocation3 + $0x188] sm:$0xff]
        %v528 = vld [vmem:[#allocation3 + $0x190] sm:$0xff]
        %v529 = vld [vmem:[#allocation3 + $0x198] sm:$0xff]
        %v530 = vld [vmem:[#allocation3 + $0x1a0] sm:$0xff]
        %v531 = vld [vmem:[#allocation3 + $0x1a8] sm:$0xff]
        %v532 = vld [vmem:[#allocation3 + $0x1b0] sm:$0xff]
        %v533 = vld [vmem:[#allocation3 + $0x1b8] sm:$0xff]
        %v534 = vld [vmem:[#allocation3 + $0x1c0] sm:$0xff]
        %v535 = vld [vmem:[#allocation3 + $0x1c8] sm:$0xff]
        %v536 = vld [vmem:[#allocation3 + $0x1d0] sm:$0xff]
        %v537 = vld [vmem:[#allocation3 + $0x1d8] sm:$0xff]
        %v538 = vld [vmem:[#allocation3 + $0x1e0] sm:$0xff]
        %v539 = vld [vmem:[#allocation3 + $0x1e8] sm:$0xff]
        %v540 = vld [vmem:[#allocation3 + $0x1f0] sm:$0xff]
        %v541 = vld [vmem:[#allocation3 + $0x1f8] sm:$0xff]
        %v542 = vld [vmem:[%s6] sm:$0xff]
        %v544 = vlaneseq
        %v545 = vshrl.u32 %v544, 7
        %v546 = vsub.s32 0, %v545
        %v547 = vrot.slane %v542, %v546
        %v548 = vlaneseq
        %v549 = vshrl.u32 %v548, 7
        %v550 = vsub.s32 1, %v549
        %v551 = vrot.slane %v542, %v550
        %v552 = vlaneseq
        %v553 = vshrl.u32 %v552, 7
        %v554 = vsub.s32 2, %v553
        %v555 = vrot.slane %v542, %v554
        %v556 = vlaneseq
        %v557 = vshrl.u32 %v556, 7
        %v558 = vsub.s32 3, %v557
        %v559 = vrot.slane %v542, %v558
        %v560 = vlaneseq
        %v561 = vshrl.u32 %v560, 7
        %v562 = vsub.s32 4, %v561
        %v563 = vrot.slane %v542, %v562
        %v564 = vlaneseq
        %v565 = vshrl.u32 %v564, 7
        %v566 = vsub.s32 5, %v565
        %v567 = vrot.slane %v542, %v566
        %v568 = vlaneseq
        %v569 = vshrl.u32 %v568, 7
        %v570 = vsub.s32 6, %v569
        %v571 = vrot.slane %v542, %v570
        %v572 = vlaneseq
        %v573 = vshrl.u32 %v572, 7
        %v574 = vsub.s32 7, %v573
        %v575 = vrot.slane %v542, %v574
        %v648 = vunpack.c.l.b16 %v478
        %v649 = vunpack.c.h.b16 %v478
        %v650 = vunpack.c.l.b16 %v479
        %v651 = vunpack.c.h.b16 %v479
        %v652 = vunpack.c.l.b16 %v480
        %v653 = vunpack.c.h.b16 %v480
        %v654 = vunpack.c.l.b16 %v481
        %v655 = vunpack.c.h.b16 %v481
        %v656 = vunpack.c.l.b16 %v482
        %v657 = vunpack.c.h.b16 %v482
        %v658 = vunpack.c.l.b16 %v483
        %v659 = vunpack.c.h.b16 %v483
        %v660 = vunpack.c.l.b16 %v484
        %v661 = vunpack.c.h.b16 %v484
        %v662 = vunpack.c.l.b16 %v485
        %v663 = vunpack.c.h.b16 %v485
        %v664 = vunpack.c.l.b16 %v486
        %v665 = vunpack.c.h.b16 %v486
        %v666 = vunpack.c.l.b16 %v487
        %v667 = vunpack.c.h.b16 %v487
        %v668 = vunpack.c.l.b16 %v488
        %v669 = vunpack.c.h.b16 %v488
        %v670 = vunpack.c.l.b16 %v489
        %v671 = vunpack.c.h.b16 %v489
        %v672 = vunpack.c.l.b16 %v490
        %v673 = vunpack.c.h.b16 %v490
        %v674 = vunpack.c.l.b16 %v491
        %v675 = vunpack.c.h.b16 %v491
        %v676 = vunpack.c.l.b16 %v492
        %v677 = vunpack.c.h.b16 %v492
        %v678 = vunpack.c.l.b16 %v493
        %v679 = vunpack.c.h.b16 %v493
        %v680 = vunpack.c.l.b16 %v494
        %v681 = vunpack.c.h.b16 %v494
        %v682 = vunpack.c.l.b16 %v495
        %v683 = vunpack.c.h.b16 %v495
        %v684 = vunpack.c.l.b16 %v496
        %v685 = vunpack.c.h.b16 %v496
        %v686 = vunpack.c.l.b16 %v497
        %v687 = vunpack.c.h.b16 %v497
        %v688 = vunpack.c.l.b16 %v498
        %v689 = vunpack.c.h.b16 %v498
        %v690 = vunpack.c.l.b16 %v499
        %v691 = vunpack.c.h.b16 %v499
        %v692 = vunpack.c.l.b16 %v500
        %v693 = vunpack.c.h.b16 %v500
        %v694 = vunpack.c.l.b16 %v501
        %v695 = vunpack.c.h.b16 %v501
        %v696 = vunpack.c.l.b16 %v502
        %v697 = vunpack.c.h.b16 %v502
        %v698 = vunpack.c.l.b16 %v503
        %v699 = vunpack.c.h.b16 %v503
        %v700 = vunpack.c.l.b16 %v504
        %v701 = vunpack.c.h.b16 %v504
        %v702 = vunpack.c.l.b16 %v505
        %v703 = vunpack.c.h.b16 %v505
        %v704 = vunpack.c.l.b16 %v506
        %v705 = vunpack.c.h.b16 %v506
        %v706 = vunpack.c.l.b16 %v507
        %v707 = vunpack.c.h.b16 %v507
        %v708 = vunpack.c.l.b16 %v508
        %v709 = vunpack.c.h.b16 %v508
        %v710 = vunpack.c.l.b16 %v509
        %v711 = vunpack.c.h.b16 %v509
        %v712 = vunpack.c.l.b16 %v510
        %v713 = vunpack.c.h.b16 %v510
        %v714 = vunpack.c.l.b16 %v511
        %v715 = vunpack.c.h.b16 %v511
        %v716 = vunpack.c.l.b16 %v512
        %v717 = vunpack.c.h.b16 %v512
        %v718 = vunpack.c.l.b16 %v513
        %v719 = vunpack.c.h.b16 %v513
        %v720 = vunpack.c.l.b16 %v514
        %v721 = vunpack.c.h.b16 %v514
        %v722 = vunpack.c.l.b16 %v515
        %v723 = vunpack.c.h.b16 %v515
        %v724 = vunpack.c.l.b16 %v516
        %v725 = vunpack.c.h.b16 %v516
        %v726 = vunpack.c.l.b16 %v517
        %v727 = vunpack.c.h.b16 %v517
        %v728 = vunpack.c.l.b16 %v518
        %v729 = vunpack.c.h.b16 %v518
        %v730 = vunpack.c.l.b16 %v519
        %v731 = vunpack.c.h.b16 %v519
        %v732 = vunpack.c.l.b16 %v520
        %v733 = vunpack.c.h.b16 %v520
        %v734 = vunpack.c.l.b16 %v521
        %v735 = vunpack.c.h.b16 %v521
        %v736 = vunpack.c.l.b16 %v522
        %v737 = vunpack.c.h.b16 %v522
        %v738 = vunpack.c.l.b16 %v523
        %v739 = vunpack.c.h.b16 %v523
        %v740 = vunpack.c.l.b16 %v524
        %v741 = vunpack.c.h.b16 %v524
        %v742 = vunpack.c.l.b16 %v525
        %v743 = vunpack.c.h.b16 %v525
        %v744 = vunpack.c.l.b16 %v526
        %v745 = vunpack.c.h.b16 %v526
        %v746 = vunpack.c.l.b16 %v527
        %v747 = vunpack.c.h.b16 %v527
        %v748 = vunpack.c.l.b16 %v528
        %v749 = vunpack.c.h.b16 %v528
        %v750 = vunpack.c.l.b16 %v529
        %v751 = vunpack.c.h.b16 %v529
        %v752 = vunpack.c.l.b16 %v530
        %v753 = vunpack.c.h.b16 %v530
        %v754 = vunpack.c.l.b16 %v531
        %v755 = vunpack.c.h.b16 %v531
        %v756 = vunpack.c.l.b16 %v532
        %v757 = vunpack.c.h.b16 %v532
        %v758 = vunpack.c.l.b16 %v533
        %v759 = vunpack.c.h.b16 %v533
        %v760 = vunpack.c.l.b16 %v534
        %v761 = vunpack.c.h.b16 %v534
        %v762 = vunpack.c.l.b16 %v535
        %v763 = vunpack.c.h.b16 %v535
        %v764 = vunpack.c.l.b16 %v536
        %v765 = vunpack.c.h.b16 %v536
        %v766 = vunpack.c.l.b16 %v537
        %v767 = vunpack.c.h.b16 %v537
        %v768 = vunpack.c.l.b16 %v538
        %v769 = vunpack.c.h.b16 %v538
        %v770 = vunpack.c.l.b16 %v539
        %v771 = vunpack.c.h.b16 %v539
        %v772 = vunpack.c.l.b16 %v540
        %v773 = vunpack.c.h.b16 %v540
        %v774 = vunpack.c.l.b16 %v541
        %v775 = vunpack.c.h.b16 %v541
        %v776 = vpack.c.b16 %v656, %v648
        %v777 = vpack.c.b16 %v657, %v649
        %v778 = vpack.c.b16 %v658, %v650
        %v779 = vpack.c.b16 %v659, %v651
        %v780 = vpack.c.b16 %v660, %v652
        %v781 = vpack.c.b16 %v661, %v653
        %v782 = vpack.c.b16 %v662, %v654
        %v783 = vpack.c.b16 %v663, %v655
        %v784 = vpack.c.b16 %v672, %v664
        %v785 = vpack.c.b16 %v673, %v665
        %v786 = vpack.c.b16 %v674, %v666
        %v787 = vpack.c.b16 %v675, %v667
        %v788 = vpack.c.b16 %v676, %v668
        %v789 = vpack.c.b16 %v677, %v669
        %v790 = vpack.c.b16 %v678, %v670
        %v791 = vpack.c.b16 %v679, %v671
        %v792 = vpack.c.b16 %v688, %v680
        %v793 = vpack.c.b16 %v689, %v681
        %v794 = vpack.c.b16 %v690, %v682
        %v795 = vpack.c.b16 %v691, %v683
        %v796 = vpack.c.b16 %v692, %v684
        %v797 = vpack.c.b16 %v693, %v685
        %v798 = vpack.c.b16 %v694, %v686
        %v799 = vpack.c.b16 %v695, %v687
        %v800 = vpack.c.b16 %v704, %v696
        %v801 = vpack.c.b16 %v705, %v697
        %v802 = vpack.c.b16 %v706, %v698
        %v803 = vpack.c.b16 %v707, %v699
        %v804 = vpack.c.b16 %v708, %v700
        %v805 = vpack.c.b16 %v709, %v701
        %v806 = vpack.c.b16 %v710, %v702
        %v807 = vpack.c.b16 %v711, %v703
        %v808 = vpack.c.b16 %v720, %v712
        %v809 = vpack.c.b16 %v721, %v713
        %v810 = vpack.c.b16 %v722, %v714
        %v811 = vpack.c.b16 %v723, %v715
        %v812 = vpack.c.b16 %v724, %v716
        %v813 = vpack.c.b16 %v725, %v717
        %v814 = vpack.c.b16 %v726, %v718
        %v815 = vpack.c.b16 %v727, %v719
        %v816 = vpack.c.b16 %v736, %v728
        %v817 = vpack.c.b16 %v737, %v729
        %v818 = vpack.c.b16 %v738, %v730
        %v819 = vpack.c.b16 %v739, %v731
        %v820 = vpack.c.b16 %v740, %v732
        %v821 = vpack.c.b16 %v741, %v733
        %v822 = vpack.c.b16 %v742, %v734
        %v823 = vpack.c.b16 %v743, %v735
        %v824 = vpack.c.b16 %v752, %v744
        %v825 = vpack.c.b16 %v753, %v745
        %v826 = vpack.c.b16 %v754, %v746
        %v827 = vpack.c.b16 %v755, %v747
        %v828 = vpack.c.b16 %v756, %v748
        %v829 = vpack.c.b16 %v757, %v749
        %v830 = vpack.c.b16 %v758, %v750
        %v831 = vpack.c.b16 %v759, %v751
        %v832 = vpack.c.b16 %v768, %v760
        %v833 = vpack.c.b16 %v769, %v761
        %v834 = vpack.c.b16 %v770, %v762
        %v835 = vpack.c.b16 %v771, %v763
        %v836 = vpack.c.b16 %v772, %v764
        %v837 = vpack.c.b16 %v773, %v765
        %v838 = vpack.c.b16 %v774, %v766
        %v839 = vpack.c.b16 %v775, %v767
        %904 = vmatprep.subr.bf16.mxu0 %v777
        %905 = vmatpush1.bf16.msra.mxu0 %v776
        %906 = vmatprep.subr.bf16.mxu0 %v785
        %907 = vmatpush1.bf16.msra.mxu0 %v784
        %908 = vmatprep.subr.bf16.mxu0 %v793
        %909 = vmatpush1.bf16.msra.mxu0 %v792
        %910 = vmatprep.subr.bf16.mxu0 %v801
        %911 = vmatpush1.bf16.msra.mxu0 %v800
        %912 = vmatprep.subr.bf16.mxu0 %v809
        %913 = vmatpush1.bf16.msra.mxu0 %v808
        %914 = vmatprep.subr.bf16.mxu0 %v817
        %915 = vmatpush1.bf16.msra.mxu0 %v816
        %916 = vmatprep.subr.bf16.mxu0 %v825
        %917 = vmatpush1.bf16.msra.mxu0 %v824
        %918 = vmatprep.subr.bf16.mxu0 %v833
        %919 = vmatpush1.bf16.msra.mxu0 %v832
        %920 = vmatprep.subr.bf16.mxu0 0
        %921 = vmatpush1.bf16.msra.mxu0 0
        %922 = vmatprep.subr.bf16.mxu0 0
        %923 = vmatpush1.bf16.msra.mxu0 0
        %924 = vmatprep.subr.bf16.mxu0 0
        %925 = vmatpush1.bf16.msra.mxu0 0
        %926 = vmatprep.subr.bf16.mxu0 0
        %927 = vmatpush1.bf16.msra.mxu0 0
        %928 = vmatprep.subr.bf16.mxu0 0
        %929 = vmatpush1.bf16.msra.mxu0 0
        %930 = vmatprep.subr.bf16.mxu0 0
        %931 = vmatpush1.bf16.msra.mxu0 0
        %932 = vmatprep.subr.bf16.mxu0 0
        %933 = vmatpush1.bf16.msra.mxu0 0
        %934 = vmatprep.subr.bf16.mxu0 0
        %935 = vmatpush1.bf16.msra.mxu0 0
        %936 = vmatprep.mubr.bf16.mxu0 0
        %937 = vmatmul.mubr.bf16.gmra.mrb[0].mxu0 %v477
        %v938 = vpop.f32.mrb[0].mxu0
        %v939 = vadd.f32 %v547, %v938
        %v940 = vpop.f32.mrb[0].mxu0
        %v941 = vadd.f32 %v551, %v940
        %v942 = vpop.f32.mrb[0].mxu0
        %v943 = vadd.f32 %v547, %v942
        %v944 = vpop.f32.mrb[0].mxu0
        %v945 = vadd.f32 %v551, %v944
        %946 = vdwg.mxu0
        %947 = vmatprep.subr.bf16.mxu0 %v779
        %948 = vmatpush1.bf16.msra.mxu0 %v778
        %949 = vmatprep.subr.bf16.mxu0 %v787
        %950 = vmatpush1.bf16.msra.mxu0 %v786
        %951 = vmatprep.subr.bf16.mxu0 %v795
        %952 = vmatpush1.bf16.msra.mxu0 %v794
        %953 = vmatprep.subr.bf16.mxu0 %v803
        %954 = vmatpush1.bf16.msra.mxu0 %v802
        %955 = vmatprep.subr.bf16.mxu0 %v811
        %956 = vmatpush1.bf16.msra.mxu0 %v810
        %957 = vmatprep.subr.bf16.mxu0 %v819
        %958 = vmatpush1.bf16.msra.mxu0 %v818
        %959 = vmatprep.subr.bf16.mxu0 %v827
        %960 = vmatpush1.bf16.msra.mxu0 %v826
        %961 = vmatprep.subr.bf16.mxu0 %v835
        %962 = vmatpush1.bf16.msra.mxu0 %v834
        %963 = vmatprep.subr.bf16.mxu0 0
        %964 = vmatpush1.bf16.msra.mxu0 0
        %965 = vmatprep.subr.bf16.mxu0 0
        %966 = vmatpush1.bf16.msra.mxu0 0
        %967 = vmatprep.subr.bf16.mxu0 0
        %968 = vmatpush1.bf16.msra.mxu0 0
        %969 = vmatprep.subr.bf16.mxu0 0
        %970 = vmatpush1.bf16.msra.mxu0 0
        %971 = vmatprep.subr.bf16.mxu0 0
        %972 = vmatpush1.bf16.msra.mxu0 0
        %973 = vmatprep.subr.bf16.mxu0 0
        %974 = vmatpush1.bf16.msra.mxu0 0
        %975 = vmatprep.subr.bf16.mxu0 0
        %976 = vmatpush1.bf16.msra.mxu0 0
        %977 = vmatprep.subr.bf16.mxu0 0
        %978 = vmatpush1.bf16.msra.mxu0 0
        %979 = vmatprep.mubr.bf16.mxu0 0
        %980 = vmatmul.mubr.bf16.gmra.mrb[0].mxu0 %v477
        %v981 = vpop.f32.mrb[0].mxu0
        %v982 = vadd.f32 %v555, %v981
        %v983 = vpop.f32.mrb[0].mxu0
        %v984 = vadd.f32 %v559, %v983
        %v985 = vpop.f32.mrb[0].mxu0
        %v986 = vadd.f32 %v555, %v985
        %v987 = vpop.f32.mrb[0].mxu0
        %v988 = vadd.f32 %v559, %v987
        %989 = vdwg.mxu0
        %990 = vmatprep.subr.bf16.mxu0 %v781
        %991 = vmatpush1.bf16.msra.mxu0 %v780
        %992 = vmatprep.subr.bf16.mxu0 %v789
        %993 = vmatpush1.bf16.msra.mxu0 %v788
        %994 = vmatprep.subr.bf16.mxu0 %v797
        %995 = vmatpush1.bf16.msra.mxu0 %v796
        %996 = vmatprep.subr.bf16.mxu0 %v805
        %997 = vmatpush1.bf16.msra.mxu0 %v804
        %998 = vmatprep.subr.bf16.mxu0 %v813
        %999 = vmatpush1.bf16.msra.mxu0 %v812
        %1000 = vmatprep.subr.bf16.mxu0 %v821
        %1001 = vmatpush1.bf16.msra.mxu0 %v820
        %1002 = vmatprep.subr.bf16.mxu0 %v829
        %1003 = vmatpush1.bf16.msra.mxu0 %v828
        %1004 = vmatprep.subr.bf16.mxu0 %v837
        %1005 = vmatpush1.bf16.msra.mxu0 %v836
        %1006 = vmatprep.subr.bf16.mxu0 0
        %1007 = vmatpush1.bf16.msra.mxu0 0
        %1008 = vmatprep.subr.bf16.mxu0 0
        %1009 = vmatpush1.bf16.msra.mxu0 0
        %1010 = vmatprep.subr.bf16.mxu0 0
        %1011 = vmatpush1.bf16.msra.mxu0 0
        %1012 = vmatprep.subr.bf16.mxu0 0
        %1013 = vmatpush1.bf16.msra.mxu0 0
        %1014 = vmatprep.subr.bf16.mxu0 0
        %1015 = vmatpush1.bf16.msra.mxu0 0
        %1016 = vmatprep.subr.bf16.mxu0 0
        %1017 = vmatpush1.bf16.msra.mxu0 0
        %1018 = vmatprep.subr.bf16.mxu0 0
        %1019 = vmatpush1.bf16.msra.mxu0 0
        %1020 = vmatprep.subr.bf16.mxu0 0
        %1021 = vmatpush1.bf16.msra.mxu0 0
        %1022 = vmatprep.mubr.bf16.mxu0 0
        %1023 = vmatmul.mubr.bf16.gmra.mrb[0].mxu0 %v477
        %v1024 = vpop.f32.mrb[0].mxu0
        %v1025 = vadd.f32 %v563, %v1024
        %v1026 = vpop.f32.mrb[0].mxu0
        %v1027 = vadd.f32 %v567, %v1026
        %v1028 = vpop.f32.mrb[0].mxu0
        %v1029 = vadd.f32 %v563, %v1028
        %v1030 = vpop.f32.mrb[0].mxu0
        %v1031 = vadd.f32 %v567, %v1030
        %1032 = vdwg.mxu0
        %1033 = vmatprep.subr.bf16.mxu0 %v783
        %1034 = vmatpush1.bf16.msra.mxu0 %v782
        %1035 = vmatprep.subr.bf16.mxu0 %v791
        %1036 = vmatpush1.bf16.msra.mxu0 %v790
        %1037 = vmatprep.subr.bf16.mxu0 %v799
        %1038 = vmatpush1.bf16.msra.mxu0 %v798
        %1039 = vmatprep.subr.bf16.mxu0 %v807
        %1040 = vmatpush1.bf16.msra.mxu0 %v806
        %1041 = vmatprep.subr.bf16.mxu0 %v815
        %1042 = vmatpush1.bf16.msra.mxu0 %v814
        %1043 = vmatprep.subr.bf16.mxu0 %v823
        %1044 = vmatpush1.bf16.msra.mxu0 %v822
        %1045 = vmatprep.subr.bf16.mxu0 %v831
        %1046 = vmatpush1.bf16.msra.mxu0 %v830
        %1047 = vmatprep.subr.bf16.mxu0 %v839
        %1048 = vmatpush1.bf16.msra.mxu0 %v838
        %1049 = vmatprep.subr.bf16.mxu0 0
        %1050 = vmatpush1.bf16.msra.mxu0 0
        %1051 = vmatprep.subr.bf16.mxu0 0
        %1052 = vmatpush1.bf16.msra.mxu0 0
        %1053 = vmatprep.subr.bf16.mxu0 0
        %1054 = vmatpush1.bf16.msra.mxu0 0
        %1055 = vmatprep.subr.bf16.mxu0 0
        %1056 = vmatpush1.bf16.msra.mxu0 0
        %1057 = vmatprep.subr.bf16.mxu0 0
        %1058 = vmatpush1.bf16.msra.mxu0 0
        %1059 = vmatprep.subr.bf16.mxu0 0
        %1060 = vmatpush1.bf16.msra.mxu0 0
        %1061 = vmatprep.subr.bf16.mxu0 0
        %1062 = vmatpush1.bf16.msra.mxu0 0
        %1063 = vmatprep.subr.bf16.mxu0 0
        %1064 = vmatpush1.bf16.msra.mxu0 0
        %1065 = vmatprep.mubr.bf16.mxu0 0
        %1066 = vmatmul.mubr.bf16.gmra.mrb[0].mxu0 %v477
        %v1067 = vpop.f32.mrb[0].mxu0
        %v1068 = vadd.f32 %v571, %v1067
        %v1069 = vpop.f32.mrb[0].mxu0
        %v1070 = vadd.f32 %v575, %v1069
        %v1071 = vpop.f32.mrb[0].mxu0
        %v1072 = vadd.f32 %v571, %v1071
        %v1073 = vpop.f32.mrb[0].mxu0
        %v1074 = vadd.f32 %v575, %v1073
        %1075 = vdwg.mxu0
        %v1076 = vmax.f32 %v939, 0.0
        %v1077 = vmax.f32 %v941, 0.0
        %v1078 = vmax.f32 %v982, 0.0
        %v1079 = vmax.f32 %v984, 0.0
        %v1080 = vmax.f32 %v1025, 0.0
        %v1081 = vmax.f32 %v1027, 0.0
        %v1082 = vmax.f32 %v1068, 0.0
        %v1083 = vmax.f32 %v1070, 0.0
        %v1084 = vmax.f32 %v943, 0.0
        %v1085 = vmax.f32 %v945, 0.0
        %v1086 = vmax.f32 %v986, 0.0
        %v1087 = vmax.f32 %v988, 0.0
        %v1088 = vmax.f32 %v1029, 0.0
        %v1089 = vmax.f32 %v1031, 0.0
        %v1090 = vmax.f32 %v1072, 0.0
        %v1091 = vmax.f32 %v1074, 0.0
        %v1092 = vld [vmem:[#allocation2] sm:$0xff]
        %v1093 = vmax.f32 %v1076, %v1084
        %v1094 = vrot.slane %v1093, 4
        %v1095 = vmax.f32 %v1093, %v1094
        %v1096 = vrot.slane %v1095, 2
        %v1097 = vmax.f32 %v1095, %v1096
        %v1098 = vrot.slane %v1097, 1
        %v1099 = vmax.f32 %v1097, %v1098
        %v1100 = vmax.f32 %v1077, %v1085
        %v1101 = vrot.slane %v1100, 4
        %v1102 = vmax.f32 %v1100, %v1101
        %v1103 = vrot.slane %v1102, 2
        %v1104 = vmax.f32 %v1102, %v1103
        %v1105 = vrot.slane %v1104, 1
        %v1106 = vmax.f32 %v1104, %v1105
        %v1107 = vmax.f32 %v1078, %v1086
        %v1108 = vrot.slane %v1107, 4
        %v1109 = vmax.f32 %v1107, %v1108
        %v1110 = vrot.slane %v1109, 2
        %v1111 = vmax.f32 %v1109, %v1110
        %v1112 = vrot.slane %v1111, 1
        %v1113 = vmax.f32 %v1111, %v1112
        %v1114 = vmax.f32 %v1079, %v1087
        %v1115 = vrot.slane %v1114, 4
        %v1116 = vmax.f32 %v1114, %v1115
        %v1117 = vrot.slane %v1116, 2
        %v1118 = vmax.f32 %v1116, %v1117
        %v1119 = vrot.slane %v1118, 1
        %v1120 = vmax.f32 %v1118, %v1119
        %v1121 = vmax.f32 %v1080, %v1088
        %v1122 = vrot.slane %v1121, 4
        %v1123 = vmax.f32 %v1121, %v1122
        %v1124 = vrot.slane %v1123, 2
        %v1125 = vmax.f32 %v1123, %v1124
        %v1126 = vrot.slane %v1125, 1
        %v1127 = vmax.f32 %v1125, %v1126
        %v1128 = vmax.f32 %v1081, %v1089
        %v1129 = vrot.slane %v1128, 4
        %v1130 = vmax.f32 %v1128, %v1129
        %v1131 = vrot.slane %v1130, 2
        %v1132 = vmax.f32 %v1130, %v1131
        %v1133 = vrot.slane %v1132, 1
        %v1134 = vmax.f32 %v1132, %v1133
        %v1135 = vmax.f32 %v1082, %v1090
        %v1136 = vrot.slane %v1135, 4
        %v1137 = vmax.f32 %v1135, %v1136
        %v1138 = vrot.slane %v1137, 2
        %v1139 = vmax.f32 %v1137, %v1138
        %v1140 = vrot.slane %v1139, 1
        %v1141 = vmax.f32 %v1139, %v1140
        %v1142 = vmax.f32 %v1083, %v1091
        %v1143 = vrot.slane %v1142, 4
        %v1144 = vmax.f32 %v1142, %v1143
        %v1145 = vrot.slane %v1144, 2
        %v1146 = vmax.f32 %v1144, %v1145
        %v1147 = vrot.slane %v1146, 1
        %v1148 = vmax.f32 %v1146, %v1147
        %v1157 = vcombine.low %v1099, %v1106
        %v1158 = vcombine.low %v1113, %v1120
        %v1159 = vcombine.low %v1127, %v1134
        %v1160 = vcombine.low %v1141, %v1148
        %v1162 = vunpack.c.l.s4 1966171168
        %v1163 = vunpack.c.0.s8 %v1162
        %v1164 = vlaneseq
        %v1165 = vshrl.u32 %v1164, 7
        %v1166 = vsub.s32 %v1163, %v1165
        %v1167 = vrot.slane %v1157, %v1166
        %v1169 = vunpack.c.l.s4 1966171168
        %v1170 = vunpack.c.0.s8 %v1169
        %v1171 = vlaneseq
        %v1172 = vshrl.u32 %v1171, 7
        %v1173 = vsub.s32 %v1170, %v1172
        %v1174 = vrot.slane %v1158, %v1173
        %v1176 = vunpack.c.l.s4 1966171168
        %v1177 = vunpack.c.0.s8 %v1176
        %v1178 = vlaneseq
        %v1179 = vshrl.u32 %v1178, 7
        %v1180 = vsub.s32 %v1177, %v1179
        %v1181 = vrot.slane %v1159, %v1180
        %v1183 = vunpack.c.l.s4 1966171168
        %v1184 = vunpack.c.0.s8 %v1183
        %v1185 = vlaneseq
        %v1186 = vshrl.u32 %v1185, 7
        %v1187 = vsub.s32 %v1184, %v1186
        %v1188 = vrot.slane %v1160, %v1187
        %v1189 = vcombine.low %v1167, %v1174
        %v1190 = vcombine.low %v1181, %v1188
        %v1192 = vunpack.c.l.s4 1966171168
        %v1193 = vunpack.c.0.s8 %v1192
        %v1194 = vlaneseq
        %v1195 = vshrl.u32 %v1194, 7
        %v1196 = vsub.s32 %v1193, %v1195
        %v1197 = vrot.slane %v1189, %v1196
        %v1199 = vunpack.c.l.s4 1966171168
        %v1200 = vunpack.c.0.s8 %v1199
        %v1201 = vlaneseq
        %v1202 = vshrl.u32 %v1201, 7
        %v1203 = vsub.s32 %v1200, %v1202
        %v1204 = vrot.slane %v1190, %v1203
        %v1205 = vcombine.low %v1197, %v1204
        %v1207 = vmax.f32 %v1092, %v1205
        %1208 = vst [vmem:[#allocation2] sm:$0xff] %v1207
        // Predicated region
        $region57: #{tpu_custom_call.1} parent=47 // pred_check
          %p1209 = pneg %p321
        $region58: #{tpu_custom_call.1} parent=47 // pred_check_branch
          %1211 = sbr.rel (%p1209) target = $region60
        $region59: #{tpu_custom_call.1} parent=47 // pred_region
          %v1212 = vld [vmem:[#allocation2] sm:$0xff]
          %1213 = vst [vmem:[%s309] sm:$0xff] %v1212
        $region60: #{tpu_custom_call.1} parent=47 // pred_fallthru
          _
        %s1214 = sand.u32 %s196, 1
        %s1215 = scalar_lea.sflag [#allocation5], %s1214
        %s1216 = sand.u32 %s196, 1
        %s1217 = smul.addr %s1216, 8
        %s1218 = scalar_lea.vmem [#allocation6], %s1217
        // Predicated region
        $region61: #{tpu_custom_call.1} parent=47 // pred_check
          %p1219 = pneg %p206
        $region62: #{tpu_custom_call.1} parent=47 // pred_check_branch
          %1221 = sbr.rel (%p1219) target = $region64
        $region63: #{tpu_custom_call.1} parent=47 // pred_region
          %s1223 = ssub.s32 128, 128
          %1224 = vsyncadd %s1215, %s1223
          %s1225 = smul.addr %s26, 8
          %s1226 = smul.addr %s1225, 16
          %s1227 = scalar_lea.hbm %s7, %s1226
          %s1229 = sshll.u32 %s1218, 4
          %s1230 = int_to_ptr.vmem [resolvable:$true] %s1229
          %1232 = dma.vmem_to_hbm [thread:$0]  %s1230, 128, %s1227, %s1215
        $region64: #{tpu_custom_call.1} parent=47 // pred_fallthru
          _
      $region48: #{tpu_custom_call.1} parent=5 // pred_fallthru
        _
      %p1233 = scmp.le.s32.totalorder 2, %s17
      // Predicated region
      $region65: #{tpu_custom_call.1} parent=5 // pred_check
        %p1234 = pneg %p1233
      $region66: #{tpu_custom_call.1} parent=5 // pred_check_branch
        %1236 = sbr.rel (%p1234) target = $region68
      $region67: #{tpu_custom_call.1} parent=5 // pred_region
        %s1237 = ssub.s32 %s17, 2
        // Predicated region
        $region69: #{tpu_custom_call.1} parent=67 // pred_check
          %p1238 = pneg %p212
        $region70: #{tpu_custom_call.1} parent=67 // pred_check_branch
          %1240 = sbr.rel (%p1238) target = $region72
        $region71: #{tpu_custom_call.1} parent=67 // pred_region
          %s1241 = sand.u32 %s197, 1
          %s1242 = scalar_lea.sflag [#allocation5], %s1241
          %s1243 = sand.u32 %s197, 1
          %s1244 = smul.addr %s1243, 8
          %s1245 = scalar_lea.vmem [#allocation6], %s1244
          %1246 = dma.done %s1242, 128
        $region72: #{tpu_custom_call.1} parent=67 // pred_fallthru
          _
      $region68: #{tpu_custom_call.1} parent=5 // pred_fallthru
        _
    $region6: #{tpu_custom_call.1} parent=1 // loop_footer
      %s21 = sadd.s32 1, %s17
    $region7: #{tpu_custom_call.1} parent=1 // loop_footer_branch
      %16 = sbr.rel target = $region3
    $region8: #{tpu_custom_call.1} parent=1 // loop_exit
      _
    %1247 = vsyncpa [#allocation4], 1
    %s1248 = scalar_lea.sflag [#allocation4], 1
    %1249 = vsyncpa %s1248, 1
    %1250 = vsyncpa [#allocation5], 1
    %s1251 = scalar_lea.sflag [#allocation5], 1
    %1252 = vsyncpa %s1251, 1

</llo_original>
